<compile_context>
chip_gen: v5e
topology: v5e:2x2
jax: 0.10.0
libtpu: 0.0.40
codegen_flags: <defaults>
</compile_context>

<pallas_src>
import functools

import jax
import jax.numpy as jnp
from jax.experimental import pallas as pl
from jax.experimental.pallas import tpu as pltpu


def _layernorm_kernel(x_ref, w_ref, b_ref, o_ref, *, eps):
    # x block: (TB, S, TH); reduction is over axis -2 (S), full in-block.
    x = x_ref[...].astype(jnp.float32)
    u = jnp.mean(x, axis=-2, keepdims=True)                       # (TB, 1, TH)
    # Single-pass variance: E[x^2] - u^2, clamped to guard tiny negative
    # values from cancellation.  All accumulation in f32.
    var = jnp.maximum(jnp.mean(x * x, axis=-2, keepdims=True) - u * u, 0.0)
    y = (x - u) * jax.lax.rsqrt(var + eps)                        # EUP rsqrt

    w = w_ref[...].astype(jnp.float32)[:, None, :]                # (1, 1, TH)
    b = b_ref[...].astype(jnp.float32)[:, None, :]                # (1, 1, TH)
    o_ref[...] = (w * y + b).astype(o_ref.dtype)


def _choose_tiles(B, S, H, block_budget_bytes):
    """Pick (tb, th) so one f32 x block is <= block_budget_bytes.

    Prefers th == H (contiguous DMA, resident weight/bias); only tiles the
    hidden axis (in lane-dense multiples of 128) when a full-H block does not
    fit the budget.  Prefers tiles that divide B / H exactly (no ragged edge
    -> no masked partial stores), and keeps >=2 batch grid steps so 2-TC
    chips (v7x) can shard the grid.
    """
    bpe = 4  # f32 compute footprint
    row_bytes = S * H * bpe  # one batch element, full hidden dim

    if row_bytes <= block_budget_bytes:
        th = H
        tb_max = max(1, block_budget_bytes // row_bytes)
        tb_max = min(tb_max, B)
        if B > 1:
            # keep at least 2 batch grid steps so both v7x TensorCores get work
            tb_max = min(tb_max, pl.cdiv(B, 2))
        tb = tb_max
        # prefer an exact divisor of B unless it would shrink the tile a lot
        for cand in range(tb_max, 0, -1):
            if B % cand == 0:
                if cand * 2 >= tb_max:
                    tb = cand
                break
        return tb, th

    # Full-H block too big: tile the hidden axis, keep full S (needed for the
    # in-block reduction) and tb = 1.
    tb = 1
    if H % 128 == 0:
        n_units = H // 128
        units_max = max(1, block_budget_bytes // (S * 128 * bpe))
        units_max = min(units_max, n_units)
        units = units_max
        for cand in range(units_max, 0, -1):
            if n_units % cand == 0:
                if cand * 2 >= units_max:
                    units = cand
                break
        th = units * 128
    else:
        # Last dim must be a multiple of 128 or the full dim; fall back to
        # full H (block may exceed the budget; vmem_limit gives headroom).
        th = H
    return tb, th


def layer_norm(x, weight, bias, *, eps=1e-12, tb=None, th=None,
               block_budget_bytes=4 * 1024 * 1024,
               vmem_limit_bytes=48 * 1024 * 1024):
    """x: [B, S, H]; weight/bias: [H].  Normalizes over S (dim -2),
    scales/shifts per hidden feature (dim -1)."""
    B, S, H = x.shape

    auto_tb, auto_th = _choose_tiles(B, S, H, block_budget_bytes)
    if tb is None:
        tb = auto_tb
    if th is None:
        th = auto_th
    tb = min(tb, B)
    th = min(th, H)

    w2 = weight.reshape(1, H)
    b2 = bias.reshape(1, H)

    # Hidden-tile axis OUTER (slow) so weight/bias blocks stay resident across
    # the inner batch loop; batch-tile axis inner (fast).
    grid = (pl.cdiv(H, th), pl.cdiv(B, tb))

    kernel = functools.partial(_layernorm_kernel, eps=float(eps))
    return pl.pallas_call(
        kernel,
        out_shape=jax.ShapeDtypeStruct((B, S, H), x.dtype),
        grid=grid,
        in_specs=[
            pl.BlockSpec((tb, S, th), lambda j, i: (i, 0, j)),   # x
            pl.BlockSpec((1, th), lambda j, i: (0, j)),          # weight (resident)
            pl.BlockSpec((1, th), lambda j, i: (0, j)),          # bias   (resident)
        ],
        out_specs=pl.BlockSpec((tb, S, th), lambda j, i: (i, 0, j)),
        compiler_params=pltpu.CompilerParams(
            dimension_semantics=("parallel", "parallel"),
            vmem_limit_bytes=vmem_limit_bytes,
        ),
    )(x, w2, b2)


if __name__ == "__main__":
    # Small shapes consistent with the module: x = [batch, seq, hidden].
    B, S, H = 4, 16, 256        # H multiple of 128 -> lane-dense tiles
    eps = 1e-12

    key = jax.random.PRNGKey(0)
    kx, kw, kb = jax.random.split(key, 3)
    x = jax.random.normal(kx, (B, S, H), jnp.float32)
    # Module default is weight=ones, bias=zeros; perturb so the test is nontrivial.
    weight = 1.0 + 0.1 * jax.random.normal(kw, (H,), jnp.float32)
    bias = 0.1 * jax.random.normal(kb, (H,), jnp.float32)

    out = layer_norm(x, weight, bias, eps=eps)
    jax.block_until_ready(out)

    # Pure-JAX reference (mirrors the PyTorch forward exactly).
    u = jnp.mean(x, axis=-2, keepdims=True)
    s = jnp.mean((x - u) ** 2, axis=-2, keepdims=True)
    ref = weight * ((x - u) / jnp.sqrt(s + eps)) + bias

    assert out.shape == (B, S, H)
    assert jnp.allclose(out, ref, atol=1e-5, rtol=1e-5), float(
        jnp.max(jnp.abs(out - ref))
    )

    print("KERNEL_OK")
</pallas_src>

<mosaic_0001>
module attributes {stable_mosaic.version = 11 : i64} {
  func.func @_layernorm_kernel(%arg0: i32, %arg1: i32, %arg2: memref<2x16x256xf32, #tpu.memory_space<vmem>>, %arg3: memref<1x256xf32, #tpu.memory_space<vmem>>, %arg4: memref<1x256xf32, #tpu.memory_space<vmem>>, %arg5: memref<2x16x256xf32, #tpu.memory_space<vmem>>) attributes {dimension_semantics = [#tpu.dimension_semantics<parallel>, #tpu.dimension_semantics<parallel>], iteration_bounds = array<i64: 1, 2>, scalar_prefetch = 0 : i64, scratch_operands = 0 : i64, tpu.core_type = #tpu.core_type<tc>, window_params = [{transform_indices = @transform_0, window_bounds = array<i64: 2, 16, 256>}, {transform_indices = @transform_1, window_bounds = array<i64: 1, 256>}, {transform_indices = @transform_2, window_bounds = array<i64: 1, 256>}, {transform_indices = @transform_3, window_bounds = array<i64: 2, 16, 256>}]} {
    %c0 = arith.constant 0 : index
    %c0_0 = arith.constant 0 : index
    %c0_1 = arith.constant 0 : index
    %0 = vector.load %arg2[%c0, %c0_0, %c0_1] : memref<2x16x256xf32, #tpu.memory_space<vmem>>, vector<2x16x256xf32>
    %cst = arith.constant dense<0.000000e+00> : vector<2x256xf32>
    %1 = vector.multi_reduction <add>, %0, %cst [1] : vector<2x16x256xf32> to vector<2x256xf32>
    %2 = vector.shape_cast %1 : vector<2x256xf32> to vector<2x1x256xf32>
    %cst_2 = arith.constant 1.600000e+01 : f32
    %3 = vector.broadcast %cst_2 : f32 to vector<2x1x256xf32>
    %4 = arith.divf %2, %3 : vector<2x1x256xf32>
    %5 = arith.mulf %0, %0 : vector<2x16x256xf32>
    %cst_3 = arith.constant dense<0.000000e+00> : vector<2x256xf32>
    %6 = vector.multi_reduction <add>, %5, %cst_3 [1] : vector<2x16x256xf32> to vector<2x256xf32>
    %7 = vector.shape_cast %6 : vector<2x256xf32> to vector<2x1x256xf32>
    %cst_4 = arith.constant 1.600000e+01 : f32
    %8 = vector.broadcast %cst_4 : f32 to vector<2x1x256xf32>
    %9 = arith.divf %7, %8 : vector<2x1x256xf32>
    %10 = arith.mulf %4, %4 : vector<2x1x256xf32>
    %11 = arith.subf %9, %10 : vector<2x1x256xf32>
    %cst_5 = arith.constant 0.000000e+00 : f32
    %12 = vector.broadcast %cst_5 : f32 to vector<2x1x256xf32>
    %13 = arith.maximumf %11, %12 : vector<2x1x256xf32>
    %14 = vector.broadcast %4 : vector<2x1x256xf32> to vector<2x16x256xf32>
    %15 = arith.subf %0, %14 : vector<2x16x256xf32>
    %cst_6 = arith.constant 9.99999996E-13 : f32
    %16 = vector.broadcast %cst_6 : f32 to vector<2x1x256xf32>
    %17 = arith.addf %13, %16 : vector<2x1x256xf32>
    %18 = math.rsqrt %17 : vector<2x1x256xf32>
    %19 = vector.broadcast %18 : vector<2x1x256xf32> to vector<2x16x256xf32>
    %20 = arith.mulf %15, %19 : vector<2x16x256xf32>
    %c0_7 = arith.constant 0 : index
    %c0_8 = arith.constant 0 : index
    %21 = vector.load %arg3[%c0_7, %c0_8] : memref<1x256xf32, #tpu.memory_space<vmem>>, vector<1x256xf32>
    %22 = vector.shape_cast %21 : vector<1x256xf32> to vector<1x1x256xf32>
    %c0_9 = arith.constant 0 : index
    %c0_10 = arith.constant 0 : index
    %23 = vector.load %arg4[%c0_9, %c0_10] : memref<1x256xf32, #tpu.memory_space<vmem>>, vector<1x256xf32>
    %24 = vector.shape_cast %23 : vector<1x256xf32> to vector<1x1x256xf32>
    %25 = vector.broadcast %22 : vector<1x1x256xf32> to vector<2x16x256xf32>
    %26 = arith.mulf %25, %20 : vector<2x16x256xf32>
    %27 = vector.broadcast %24 : vector<1x1x256xf32> to vector<2x16x256xf32>
    %28 = arith.addf %26, %27 : vector<2x16x256xf32>
    %c0_11 = arith.constant 0 : index
    %c0_12 = arith.constant 0 : index
    %c0_13 = arith.constant 0 : index
    %29 = vector.load %arg5[%c0_11, %c0_12, %c0_13] : memref<2x16x256xf32, #tpu.memory_space<vmem>>, vector<2x16x256xf32>
    tpu.vector_store %arg5[%c0_11, %c0_12, %c0_13], %28 {strides = array<i32>} : memref<2x16x256xf32, #tpu.memory_space<vmem>>, vector<2x16x256xf32>,
    return
  }
  func.func @transform_0(%arg0: i32, %arg1: i32) -> (i32, i32, i32) {
    %c0_i32 = arith.constant 0 : i32
    %c0_i32_0 = arith.constant 0 : i32
    return %arg1, %c0_i32, %arg0 : i32, i32, i32
  }
  func.func @transform_1(%arg0: i32, %arg1: i32) -> (i32, i32) {
    %c0_i32 = arith.constant 0 : i32
    %c0_i32_0 = arith.constant 0 : i32
    return %c0_i32, %arg0 : i32, i32
  }
  func.func @transform_2(%arg0: i32, %arg1: i32) -> (i32, i32) {
    %c0_i32 = arith.constant 0 : i32
    %c0_i32_0 = arith.constant 0 : i32
    return %c0_i32, %arg0 : i32, i32
  }
  func.func @transform_3(%arg0: i32, %arg1: i32) -> (i32, i32, i32) {
    %c0_i32 = arith.constant 0 : i32
    %c0_i32_0 = arith.constant 0 : i32
    return %arg1, %c0_i32, %arg0 : i32, i32, i32
  }
}

</mosaic_0001>

<llo_original>
// kernel: tpu_custom_call.1
$region0: #{tpu_custom_call.1}
  #allocation0 [shape = 'u32[]', space=smem, size = 0x4, offset = 0x4, fixed_abs, tag = 'smem constant byte address 0x4 - core index']
  #allocation1 [shape = 'u32[72,128]{1,0:T(1,128)}', space=vmem, size = 0x9000, scoped, tag = 'internal scratch']
  %s0 = inlined_call_operand.hbm [shape: f32[4,16,256], index: 0, kind: input, shape index: {}]
  %s1 = inlined_call_operand.hbm [shape: f32[1,256], index: 1, kind: input, shape index: {}]
  %s2 = inlined_call_operand.hbm [shape: f32[1,256], index: 2, kind: input, shape index: {}]
  %s3 = inlined_call_operand.hbm [shape: f32[4,16,256], index: 3, kind: output, shape index: {}]
  %s4 = sld [smem:[#allocation0]]
  $region57: #{tpu_custom_call.1} parent=0
    _
  %s6 = ssub.s32 1, %s4
  %s7 = scalar_select 0, %s6, %s4
  $region1: #{tpu_custom_call.1} parent=0
    #allocation2 [shape = 'u8[65536]{0}', space=vmem, size = 0x10000, scoped, tag = 'input window, operand 0']
    #allocation3 [shape = 's32[2]{0}', space=sflag, size = 0x8, scoped, tag = 'scoped memory for tpu_custom_call.1']
    #allocation4 [shape = 's32[2]{0}', space=sflag, size = 0x8, scoped, tag = 'scoped memory for tpu_custom_call.1']
    #allocation5 [shape = 'u8[1024]{0}', space=vmem, size = 0x400, scoped, tag = 'input window, operand 1, single buffered']
    #allocation6 [shape = 's32[1]{0}', space=sflag, size = 0x4, scoped, tag = 'scoped memory for tpu_custom_call.1']
    #allocation7 [shape = 'u8[1024]{0}', space=vmem, size = 0x400, scoped, tag = 'input window, operand 2, single buffered']
    #allocation8 [shape = 'u8[65536]{0}', space=vmem, size = 0x10000, scoped, tag = 'output window, operand 0']
    %8 = vsyncpa [#allocation3], 0
    %s9 = scalar_lea.sflag [#allocation3], 1
    %10 = vsyncpa %s9, 0
    %11 = vsyncpa [#allocation6], 0
    %12 = vsyncpa [#allocation4], 0
    %s13 = scalar_lea.sflag [#allocation4], 1
    %14 = vsyncpa %s13, 0
    loop: start=0, step=1, limit=4
    $region2: #{tpu_custom_call.1} parent=1 // loop_pre_header
      _
    $region3: #{tpu_custom_call.1} parent=1 // loop_header
      %s16 = sphi 0, %s20
      %p17 = scmp.ge.s32.totalorder %s16, 4
      %s23 = sphi 0, %s35
      %s24 = sphi 0, %s31
      %s25 = sphi 0, %s23
      %s26 = sphi 0, %s24
      %s27 = sphi 0, %s25
      %s28 = sphi 0, %s26
      %s40 = sphi 0, %s42
      %s43 = sphi 0, %s40
      %s44 = sphi 0, %s43
      %s60 = sphi 0, %s44
      %s66 = sphi 0, %s68
      %s69 = sphi 0, %s66
      %s70 = sphi 0, %s69
      %s86 = sphi 0, %s70
      %s92 = sphi 0, %s94
      %s95 = sphi 0, %s92
      %s96 = sphi 0, %s95
      %s112 = sphi 0, %s96
      %s120 = sphi 0, %s122
      %s123 = sphi 0, %s120
      %s124 = sphi 0, %s123
      %s140 = sphi 0, %s124
    $region4: #{tpu_custom_call.1} parent=1 // loop_header_branch
      %19 = sbr.rel (%p17) target = $region8
    $region5: #{tpu_custom_call.1} parent=1 // loop_body
      %s21 = ssub.s32 %s16, 1
      %s22 = ssub.s32 %s16, 2
      %s29 = sadd.s32 1, %s24
      %p30 = scmp.ge.s32.totalorder %s29, 2
      %s31 = scalar_select %p30, 0, %s29
      %s32 = sadd.s32 1, %s23
      %s33 = scalar_select %p30, %s32, %s23
      %p34 = scmp.ge.s32.totalorder %s33, 1
      %s35 = scalar_select %p34, 0, %s33
      %s36 = ssub.s32 %s24, %s31
      %s37 = ssub.s32 %s23, %s35
      %s38 = sor.u32 %s36, %s37
      %p39 = scmp.eq.s32.totalorder %s38, 0
      %s41 = sadd.s32 %s40, 1
      %s42 = scalar_select %p39, %s40, %s41
      %p45 = pneg %p39
      %p46 = scmp.eq.s32.totalorder %s16, 1
      %p47 = por %p45, %p46
      %p48 = scmp.ne.s32.totalorder %s40, %s43
      %p49 = scmp.eq.s32.totalorder %s16, 0
      %p50 = por %p48, %p49
      %p51 = scmp.ne.s32.totalorder %s40, %s43
      %p52 = scmp.eq.s32.totalorder %s21, 1
      %p53 = por %p51, %p52
      %p54 = scmp.ne.s32.totalorder %s43, %s44
      %p55 = scmp.eq.s32.totalorder %s21, 0
      %p56 = por %p54, %p55
      %p57 = scmp.ne.s32.totalorder %s43, %s44
      %p58 = scmp.eq.s32.totalorder %s22, 1
      %p59 = por %p57, %p58
      %p61 = scmp.ne.s32.totalorder %s44, %s60
      %p62 = scmp.eq.s32.totalorder %s22, 0
      %p63 = por %p61, %p62
      %s64 = ssub.s32 %s23, %s35
      %p65 = scmp.eq.s32.totalorder %s64, 0
      %s67 = sadd.s32 %s66, 1
      %s68 = scalar_select %p65, %s66, %s67
      %p71 = pneg %p65
      %p72 = scmp.eq.s32.totalorder %s16, 1
      %p73 = por %p71, %p72
      %p74 = scmp.ne.s32.totalorder %s66, %s69
      %p75 = scmp.eq.s32.totalorder %s16, 0
      %p76 = por %p74, %p75
      %p77 = scmp.ne.s32.totalorder %s66, %s69
      %p78 = scmp.eq.s32.totalorder %s21, 1
      %p79 = por %p77, %p78
      %p80 = scmp.ne.s32.totalorder %s69, %s70
      %p81 = scmp.eq.s32.totalorder %s21, 0
      %p82 = por %p80, %p81
      %p83 = scmp.ne.s32.totalorder %s69, %s70
      %p84 = scmp.eq.s32.totalorder %s22, 1
      %p85 = por %p83, %p84
      %p87 = scmp.ne.s32.totalorder %s70, %s86
      %p88 = scmp.eq.s32.totalorder %s22, 0
      %p89 = por %p87, %p88
      %s90 = ssub.s32 %s23, %s35
      %p91 = scmp.eq.s32.totalorder %s90, 0
      %s93 = sadd.s32 %s92, 1
      %s94 = scalar_select %p91, %s92, %s93
      %p97 = pneg %p91
      %p98 = scmp.eq.s32.totalorder %s16, 1
      %p99 = por %p97, %p98
      %p100 = scmp.ne.s32.totalorder %s92, %s95
      %p101 = scmp.eq.s32.totalorder %s16, 0
      %p102 = por %p100, %p101
      %p103 = scmp.ne.s32.totalorder %s92, %s95
      %p104 = scmp.eq.s32.totalorder %s21, 1
      %p105 = por %p103, %p104
      %p106 = scmp.ne.s32.totalorder %s95, %s96
      %p107 = scmp.eq.s32.totalorder %s21, 0
      %p108 = por %p106, %p107
      %p109 = scmp.ne.s32.totalorder %s95, %s96
      %p110 = scmp.eq.s32.totalorder %s22, 1
      %p111 = por %p109, %p110
      %p113 = scmp.ne.s32.totalorder %s96, %s112
      %p114 = scmp.eq.s32.totalorder %s22, 0
      %p115 = por %p113, %p114
      %s116 = ssub.s32 %s24, %s31
      %s117 = ssub.s32 %s23, %s35
      %s118 = sor.u32 %s116, %s117
      %p119 = scmp.eq.s32.totalorder %s118, 0
      %s121 = sadd.s32 %s120, 1
      %s122 = scalar_select %p119, %s120, %s121
      %p125 = pneg %p119
      %p126 = scmp.eq.s32.totalorder %s16, 1
      %p127 = por %p125, %p126
      %p128 = scmp.ne.s32.totalorder %s120, %s123
      %p129 = scmp.eq.s32.totalorder %s16, 0
      %p130 = por %p128, %p129
      %p131 = scmp.ne.s32.totalorder %s120, %s123
      %p132 = scmp.eq.s32.totalorder %s21, 1
      %p133 = por %p131, %p132
      %p134 = scmp.ne.s32.totalorder %s123, %s124
      %p135 = scmp.eq.s32.totalorder %s21, 0
      %p136 = por %p134, %p135
      %p137 = scmp.ne.s32.totalorder %s123, %s124
      %p138 = scmp.eq.s32.totalorder %s22, 1
      %p139 = por %p137, %p138
      %p141 = scmp.ne.s32.totalorder %s124, %s140
      %p142 = scmp.eq.s32.totalorder %s22, 0
      %p143 = por %p141, %p142
      %p144 = scmp.le.s32.totalorder 1, %s16
      %p145 = scmp.lt.s32.totalorder %s16, 3
      %p146 = pnand %p144, %p145
      %p147 = pneg %p146
      // Predicated region
      $region9: #{tpu_custom_call.1} parent=5 // pred_check
        _
      $region10: #{tpu_custom_call.1} parent=5 // pred_check_branch
        %149 = sbr.rel (%p146) target = $region12
      $region11: #{tpu_custom_call.1} parent=5 // pred_region
        %s150 = ssub.s32 %s16, 1
        // Predicated region
        $region13: #{tpu_custom_call.1} parent=11 // pred_check
          %p151 = pneg %p82
        $region14: #{tpu_custom_call.1} parent=11 // pred_check_branch
          %153 = sbr.rel (%p151) target = $region16
        $region15: #{tpu_custom_call.1} parent=11 // pred_region
          %s154 = smul.u32 2, %s25
          %156 = vsyncadd [#allocation6], 0
          %s157 = scalar_lea.hbm %s1, %s154
          %s159 = sshll.u32 %s157, 4
          %s160 = int_to_ptr.hbm [resolvable:$true] %s159
          %s161 = sshll.u32 [#allocation5], 4
          %s162 = int_to_ptr.vmem [resolvable:$true] %s161
          %164 = dma.hbm_to_vmem [thread:$0]  %s160, 32, %s162, [#allocation6]
        $region16: #{tpu_custom_call.1} parent=11 // pred_fallthru
          _
        // Predicated region
        $region17: #{tpu_custom_call.1} parent=11 // pred_check
          %p165 = pneg %p108
        $region18: #{tpu_custom_call.1} parent=11 // pred_check_branch
          %167 = sbr.rel (%p165) target = $region20
        $region19: #{tpu_custom_call.1} parent=11 // pred_region
          %s168 = smul.u32 2, %s25
          %170 = vsyncadd [#allocation6], 0
          %s171 = scalar_lea.hbm %s2, %s168
          %s173 = sshll.u32 %s171, 4
          %s174 = int_to_ptr.hbm [resolvable:$true] %s173
          %s175 = sshll.u32 [#allocation7], 4
          %s176 = int_to_ptr.vmem [resolvable:$true] %s175
          %178 = dma.hbm_to_vmem [thread:$0]  %s174, 32, %s176, [#allocation6]
        $region20: #{tpu_custom_call.1} parent=11 // pred_fallthru
          _
      $region12: #{tpu_custom_call.1} parent=5 // pred_fallthru
        _
      %p179 = scmp.lt.s32.totalorder %s16, 2
      // Predicated region
      $region21: #{tpu_custom_call.1} parent=5 // pred_check
        %p180 = pneg %p179
      $region22: #{tpu_custom_call.1} parent=5 // pred_check_branch
        %182 = sbr.rel (%p180) target = $region24
      $region23: #{tpu_custom_call.1} parent=5 // pred_region
        // Predicated region
        $region25: #{tpu_custom_call.1} parent=23 // pred_check
          %p183 = pneg %p50
        $region26: #{tpu_custom_call.1} parent=23 // pred_check_branch
          %185 = sbr.rel (%p183) target = $region28
        $region27: #{tpu_custom_call.1} parent=23 // pred_region
          %s186 = sand.u32 %s40, 1
          %s187 = scalar_lea.sflag [#allocation3], %s186
          %s188 = sand.u32 %s40, 1
          %s189 = smul.addr %s188, 64
          %s190 = scalar_lea.vmem [#allocation2], %s189
          %s191 = smul.u32 2, %s24
          %s192 = smul.u32 2, %s23
          %194 = vsyncadd %s187, 0
          %s195 = smul.addr %s191, 4
          %s196 = sadd.s32 %s192, %s195
          %s197 = smul.addr %s196, 8
          %s198 = scalar_lea.hbm %s0, %s197
          %s199 = sshll.u32 %s198, 4
          %s200 = int_to_ptr.hbm [resolvable:$true] %s199
          %s201 = sshll.u32 %s190, 4
          %s202 = int_to_ptr.vmem [resolvable:$true] %s201
          %207 = dma.hbm_to_vmem [thread:$0]  %s200, 1024, %s202, %s187, 256, 256, 16
        $region28: #{tpu_custom_call.1} parent=23 // pred_fallthru
          _
      $region24: #{tpu_custom_call.1} parent=5 // pred_fallthru
        _
      %p208 = scmp.le.s32.totalorder 1, %s16
      %p209 = scmp.lt.s32.totalorder %s16, 3
      %p210 = pnand %p208, %p209
      %p211 = pneg %p210
      // Predicated region
      $region29: #{tpu_custom_call.1} parent=5 // pred_check
        _
      $region30: #{tpu_custom_call.1} parent=5 // pred_check_branch
        %213 = sbr.rel (%p210) target = $region32
      $region31: #{tpu_custom_call.1} parent=5 // pred_region
        %s214 = ssub.s32 %s16, 1
        %s215 = sand.u32 %s43, 1
        %s216 = scalar_lea.sflag [#allocation3], %s215
        %s217 = sand.u32 %s43, 1
        %s218 = smul.addr %s217, 64
        %s219 = scalar_lea.vmem [#allocation2], %s218
        // Predicated region
        $region33: #{tpu_custom_call.1} parent=31 // pred_check
          %p220 = pneg %p56
        $region34: #{tpu_custom_call.1} parent=31 // pred_check_branch
          %222 = sbr.rel (%p220) target = $region36
        $region35: #{tpu_custom_call.1} parent=31 // pred_region
          %224 = dma.done %s216, 1024
        $region36: #{tpu_custom_call.1} parent=31 // pred_fallthru
          _
        // Predicated region
        $region37: #{tpu_custom_call.1} parent=31 // pred_check
          %p225 = pneg %p82
        $region38: #{tpu_custom_call.1} parent=31 // pred_check_branch
          %227 = sbr.rel (%p225) target = $region40
        $region39: #{tpu_custom_call.1} parent=31 // pred_region
          %229 = dma.done [#allocation6], 32
        $region40: #{tpu_custom_call.1} parent=31 // pred_fallthru
          _
        // Predicated region
        $region41: #{tpu_custom_call.1} parent=31 // pred_check
          %p230 = pneg %p108
        $region42: #{tpu_custom_call.1} parent=31 // pred_check_branch
          %232 = sbr.rel (%p230) target = $region44
        $region43: #{tpu_custom_call.1} parent=31 // pred_region
          %234 = dma.done [#allocation6], 32
        $region44: #{tpu_custom_call.1} parent=31 // pred_fallthru
          _
        %s235 = sand.u32 %s43, 1
        %s236 = scalar_lea.sflag [#allocation3], %s235
        %s237 = sand.u32 %s43, 1
        %s238 = smul.addr %s237, 64
        %s239 = scalar_lea.vmem [#allocation2], %s238
        %p240 = pneg %p56
        %p241 = pneg %p53
        %p242 = pneg %p82
        %p243 = pneg %p79
        %p244 = pneg %p108
        %p245 = pneg %p105
        %p246 = pneg %p136
        %p247 = pneg %p133
        %s248 = sand.u32 %s123, 1
        %s249 = scalar_lea.sflag [#allocation4], %s248
        %s250 = sand.u32 %s123, 1
        %s251 = smul.addr %s250, 64
        %s252 = scalar_lea.vmem [#allocation8], %s251
        %s253 = smul.u32 2, %s26
        %s254 = smul.u32 2, %s25
        %s255 = smul.u32 2, %s25
        %s256 = smul.u32 2, %s25
        %s257 = smul.u32 2, %s26
        %s258 = smul.u32 2, %s25
        %v259 = vld [vmem:[%s219] sm:$0xff]
        %v260 = vld [vmem:[%s219 + $0x8] sm:$0xff]
        %v261 = vld [vmem:[%s219 + $0x10] sm:$0xff]
        %v262 = vld [vmem:[%s219 + $0x18] sm:$0xff]
        %v263 = vld [vmem:[%s219 + $0x20] sm:$0xff]
        %v264 = vld [vmem:[%s219 + $0x28] sm:$0xff]
        %v265 = vld [vmem:[%s219 + $0x30] sm:$0xff]
        %v266 = vld [vmem:[%s219 + $0x38] sm:$0xff]
        %v267 = vadd.f32 %v259, %v261
        %v268 = vrot.slane %v267, 4
        %v269 = vadd.f32 %v267, %v268
        %v270 = vrot.slane %v269, 2
        %v271 = vadd.f32 %v269, %v270
        %v272 = vrot.slane %v271, 1
        %v273 = vadd.f32 %v271, %v272
        %v274 = vadd.f32 %v260, %v262
        %v275 = vrot.slane %v274, 4
        %v276 = vadd.f32 %v274, %v275
        %v277 = vrot.slane %v276, 2
        %v278 = vadd.f32 %v276, %v277
        %v279 = vrot.slane %v278, 1
        %v280 = vadd.f32 %v278, %v279
        %v281 = vadd.f32 %v263, %v265
        %v282 = vrot.slane %v281, 4
        %v283 = vadd.f32 %v281, %v282
        %v284 = vrot.slane %v283, 2
        %v285 = vadd.f32 %v283, %v284
        %v286 = vrot.slane %v285, 1
        %v287 = vadd.f32 %v285, %v286
        %v288 = vadd.f32 %v264, %v266
        %v289 = vrot.slane %v288, 4
        %v290 = vadd.f32 %v288, %v289
        %v291 = vrot.slane %v290, 2
        %v292 = vadd.f32 %v290, %v291
        %v293 = vrot.slane %v292, 1
        %v294 = vadd.f32 %v292, %v293
        %v295 = vrcp.pop 16.0
        %v296 = vmul.f32 16.0, %v295
        %v297 = vsub.f32 1.0, %v296
        %v298 = vmul.f32 %v295, %v297
        %v299 = vadd.f32 %v295, %v298
        %vm300 = vweird.f32 %v295
        %v301 = vsel %vm300, %v295, %v299
        %v302 = vmul.f32 %v273, %v301
        %v303 = vmul.f32 %v280, %v301
        %v304 = vmul.f32 %v287, %v301
        %v305 = vmul.f32 %v294, %v301
        %v306 = vmul.f32 %v259, %v259
        %v307 = vmul.f32 %v260, %v260
        %v308 = vmul.f32 %v261, %v261
        %v309 = vmul.f32 %v262, %v262
        %v310 = vmul.f32 %v263, %v263
        %v311 = vmul.f32 %v264, %v264
        %v312 = vmul.f32 %v265, %v265
        %v313 = vmul.f32 %v266, %v266
        %v314 = vadd.f32 %v306, %v308
        %v315 = vrot.slane %v314, 4
        %v316 = vadd.f32 %v314, %v315
        %v317 = vrot.slane %v316, 2
        %v318 = vadd.f32 %v316, %v317
        %v319 = vrot.slane %v318, 1
        %v320 = vadd.f32 %v318, %v319
        %v321 = vadd.f32 %v307, %v309
        %v322 = vrot.slane %v321, 4
        %v323 = vadd.f32 %v321, %v322
        %v324 = vrot.slane %v323, 2
        %v325 = vadd.f32 %v323, %v324
        %v326 = vrot.slane %v325, 1
        %v327 = vadd.f32 %v325, %v326
        %v328 = vadd.f32 %v310, %v312
        %v329 = vrot.slane %v328, 4
        %v330 = vadd.f32 %v328, %v329
        %v331 = vrot.slane %v330, 2
        %v332 = vadd.f32 %v330, %v331
        %v333 = vrot.slane %v332, 1
        %v334 = vadd.f32 %v332, %v333
        %v335 = vadd.f32 %v311, %v313
        %v336 = vrot.slane %v335, 4
        %v337 = vadd.f32 %v335, %v336
        %v338 = vrot.slane %v337, 2
        %v339 = vadd.f32 %v337, %v338
        %v340 = vrot.slane %v339, 1
        %v341 = vadd.f32 %v339, %v340
        %v342 = vmul.f32 %v320, %v301
        %v343 = vmul.f32 %v327, %v301
        %v344 = vmul.f32 %v334, %v301
        %v345 = vmul.f32 %v341, %v301
        %v346 = vmul.f32 %v302, %v302
        %v347 = vmul.f32 %v303, %v303
        %v348 = vmul.f32 %v304, %v304
        %v349 = vmul.f32 %v305, %v305
        %v350 = vsub.f32 %v342, %v346
        %v351 = vsub.f32 %v343, %v347
        %v352 = vsub.f32 %v344, %v348
        %v353 = vsub.f32 %v345, %v349
        %v354 = vmax.f32 %v350, 0.0
        %v355 = vmax.f32 %v351, 0.0
        %v356 = vmax.f32 %v352, 0.0
        %v357 = vmax.f32 %v353, 0.0
        %v358 = vsub.f32 %v259, %v302
        %v359 = vsub.f32 %v260, %v303
        %v360 = vsub.f32 %v261, %v302
        %v361 = vsub.f32 %v262, %v303
        %v362 = vsub.f32 %v263, %v304
        %v363 = vsub.f32 %v264, %v305
        %v364 = vsub.f32 %v265, %v304
        %v365 = vsub.f32 %v266, %v305
        %v366 = vadd.f32 %v354, 1e-12
        %v367 = vadd.f32 %v355, 1e-12
        %v368 = vadd.f32 %v356, 1e-12
        %v369 = vadd.f32 %v357, 1e-12
        %v370 = vrsqrt.pop %v366
        %v371 = vmul.f32 %v370, %v366
        %v372 = vmul.f32 %v371, %v370
        %v373 = vmul.f32 0.5, %v372
        %v374 = vsub.f32 1.5, %v373
        %v375 = vmul.f32 %v370, %v374
        %vm376 = vweird.f32 %v366
        %vm377 = vweird.f32 %v370
        %vm378 = vmor %vm376, %vm377
        %v379 = vsel %vm378, %v370, %v375
        %v380 = vrsqrt.pop %v367
        %v381 = vmul.f32 %v380, %v367
        %v382 = vmul.f32 %v381, %v380
        %v383 = vmul.f32 0.5, %v382
        %v384 = vsub.f32 1.5, %v383
        %v385 = vmul.f32 %v380, %v384
        %vm386 = vweird.f32 %v367
        %vm387 = vweird.f32 %v380
        %vm388 = vmor %vm386, %vm387
        %v389 = vsel %vm388, %v380, %v385
        %v390 = vrsqrt.pop %v368
        %v391 = vmul.f32 %v390, %v368
        %v392 = vmul.f32 %v391, %v390
        %v393 = vmul.f32 0.5, %v392
        %v394 = vsub.f32 1.5, %v393
        %v395 = vmul.f32 %v390, %v394
        %vm396 = vweird.f32 %v368
        %vm397 = vweird.f32 %v390
        %vm398 = vmor %vm396, %vm397
        %v399 = vsel %vm398, %v390, %v395
        %v400 = vrsqrt.pop %v369
        %v401 = vmul.f32 %v400, %v369
        %v402 = vmul.f32 %v401, %v400
        %v403 = vmul.f32 0.5, %v402
        %v404 = vsub.f32 1.5, %v403
        %v405 = vmul.f32 %v400, %v404
        %vm406 = vweird.f32 %v369
        %vm407 = vweird.f32 %v400
        %vm408 = vmor %vm406, %vm407
        %v409 = vsel %vm408, %v400, %v405
        %v410 = vmul.f32 %v358, %v379
        %v411 = vmul.f32 %v359, %v389
        %v412 = vmul.f32 %v360, %v379
        %v413 = vmul.f32 %v361, %v389
        %v414 = vmul.f32 %v362, %v399
        %v415 = vmul.f32 %v363, %v409
        %v416 = vmul.f32 %v364, %v399
        %v417 = vmul.f32 %v365, %v409
        %v418 = vld [vmem:[#allocation5] sm:$0x3]
        %v419 = vld [vmem:[#allocation7] sm:$0x3]
        %v421 = vperm.slane %v418, 0
        %v422 = vperm.slane %v418, 1
        %v425 = vmul.f32 %v421, %v410
        %v426 = vmul.f32 %v422, %v411
        %v427 = vmul.f32 %v421, %v412
        %v428 = vmul.f32 %v422, %v413
        %v429 = vmul.f32 %v421, %v414
        %v430 = vmul.f32 %v422, %v415
        %v431 = vmul.f32 %v421, %v416
        %v432 = vmul.f32 %v422, %v417
        %v434 = vperm.slane %v419, 0
        %v435 = vperm.slane %v419, 1
        %v438 = vadd.f32 %v425, %v434
        %v439 = vadd.f32 %v426, %v435
        %v440 = vadd.f32 %v427, %v434
        %v441 = vadd.f32 %v428, %v435
        %v442 = vadd.f32 %v429, %v434
        %v443 = vadd.f32 %v430, %v435
        %v444 = vadd.f32 %v431, %v434
        %v445 = vadd.f32 %v432, %v435
        %446 = vst [vmem:[%s252] sm:$0xff] %v438
        %447 = vst [vmem:[%s252 + $0x8] sm:$0xff] %v439
        %448 = vst [vmem:[%s252 + $0x10] sm:$0xff] %v440
        %449 = vst [vmem:[%s252 + $0x18] sm:$0xff] %v441
        %450 = vst [vmem:[%s252 + $0x20] sm:$0xff] %v442
        %451 = vst [vmem:[%s252 + $0x28] sm:$0xff] %v443
        %452 = vst [vmem:[%s252 + $0x30] sm:$0xff] %v444
        %453 = vst [vmem:[%s252 + $0x38] sm:$0xff] %v445
        %s454 = sand.u32 %s123, 1
        %s455 = scalar_lea.sflag [#allocation4], %s454
        %s456 = sand.u32 %s123, 1
        %s457 = smul.addr %s456, 64
        %s458 = scalar_lea.vmem [#allocation8], %s457
        // Predicated region
        $region45: #{tpu_custom_call.1} parent=31 // pred_check
          %p459 = pneg %p133
        $region46: #{tpu_custom_call.1} parent=31 // pred_check_branch
          %461 = sbr.rel (%p459) target = $region48
        $region47: #{tpu_custom_call.1} parent=31 // pred_region
          %s462 = smul.u32 2, %s26
          %s463 = smul.u32 2, %s25
          %465 = vsyncadd %s455, 0
          %s466 = smul.addr %s462, 4
          %s467 = sadd.s32 %s463, %s466
          %s468 = smul.addr %s467, 8
          %s469 = scalar_lea.hbm %s3, %s468
          %s470 = sshll.u32 %s458, 4
          %s471 = int_to_ptr.vmem [resolvable:$true] %s470
          %s472 = sshll.u32 %s469, 4
          %s473 = int_to_ptr.hbm [resolvable:$true] %s472
          %478 = dma.vmem_to_hbm [thread:$0]  %s471, 1024, %s473, %s455, 256, 256, 16
        $region48: #{tpu_custom_call.1} parent=31 // pred_fallthru
          _
      $region32: #{tpu_custom_call.1} parent=5 // pred_fallthru
        _
      %p479 = scmp.le.s32.totalorder 2, %s16
      // Predicated region
      $region49: #{tpu_custom_call.1} parent=5 // pred_check
        %p480 = pneg %p479
      $region50: #{tpu_custom_call.1} parent=5 // pred_check_branch
        %482 = sbr.rel (%p480) target = $region52
      $region51: #{tpu_custom_call.1} parent=5 // pred_region
        %s483 = ssub.s32 %s16, 2
        // Predicated region
        $region53: #{tpu_custom_call.1} parent=51 // pred_check
          %p484 = pneg %p139
        $region54: #{tpu_custom_call.1} parent=51 // pred_check_branch
          %486 = sbr.rel (%p484) target = $region56
        $region55: #{tpu_custom_call.1} parent=51 // pred_region
          %s487 = sand.u32 %s124, 1
          %s488 = scalar_lea.sflag [#allocation4], %s487
          %s489 = sand.u32 %s124, 1
          %s490 = smul.addr %s489, 64
          %s491 = scalar_lea.vmem [#allocation8], %s490
          %493 = dma.done %s488, 1024
        $region56: #{tpu_custom_call.1} parent=51 // pred_fallthru
          _
      $region52: #{tpu_custom_call.1} parent=5 // pred_fallthru
        _
    $region6: #{tpu_custom_call.1} parent=1 // loop_footer
      %s20 = sadd.s32 1, %s16
    $region7: #{tpu_custom_call.1} parent=1 // loop_footer_branch
      %15 = sbr.rel target = $region3
    $region8: #{tpu_custom_call.1} parent=1 // loop_exit
      _
    %494 = vsyncpa [#allocation3], 1
    %s495 = scalar_lea.sflag [#allocation3], 1
    %496 = vsyncpa %s495, 1
    %497 = vsyncpa [#allocation6], 1
    %498 = vsyncpa [#allocation4], 1
    %s499 = scalar_lea.sflag [#allocation4], 1
    %500 = vsyncpa %s499, 1

</llo_original>
